<compile_context>
chip_gen: v7x
topology: tpu7x:2x2x1
jax: 0.10.0
libtpu: 0.0.40
codegen_flags: <defaults>
</compile_context>

<pallas_src>
import jax
import jax.numpy as jnp
from jax.experimental import pallas as pl
from jax.experimental.pallas import tpu as pltpu

NEG_SLOPE = 0.01      # PyTorch nn.LeakyReLU() default
D_IN = 256            # input / hidden width of mog_netQ
D_PAD = 128           # padded output lanes (lane-dense); real output = 2
D_OUT = 2
N_LAYERS = 3


def _round_up(x, m):
    return (x + m - 1) // m * m


def mog_netq_kernel(x_ref, w_ref, b_ref, o_ref):
    """x_ref: (TB, 256) f32/bf16; w_ref: (3, 256, 256) bf16;
    b_ref: (3, 1, 256) f32; o_ref: (TB, 128) bf16 (cols [:2] meaningful)."""
    h = x_ref[...].astype(jnp.bfloat16)
    for i in range(N_LAYERS - 1):               # two hidden 256 -> 256 layers
        z = jnp.dot(h, w_ref[i], preferred_element_type=jnp.float32)
        z = z + b_ref[i]                        # (1, 256) broadcast, f32 VPU
        h = jnp.maximum(z, NEG_SLOPE * z).astype(jnp.bfloat16)   # LeakyReLU
    # Final layer 256 -> 2, padded to 128 output lanes (lane-dense store).
    z = jnp.dot(h, w_ref[2, :, :D_PAD], preferred_element_type=jnp.float32)
    z = z + b_ref[2, :, :D_PAD]
    o_ref[...] = z.astype(o_ref.dtype)


def mog_netq_forward(x, w_packed, b_packed, *, block_batch=1024):
    """x: (batch, 256) f32 or bf16 -> (batch, 2) f32."""
    batch, d_in = x.shape
    assert d_in == D_IN

    # Row tile: multiple of 8, no wrapper padding (ragged last block is fine).
    tb = min(block_batch, _round_up(batch, 8))
    if batch > 16:
        # Guarantee >= 2 grid steps so v7x's two TensorCores both get work.
        tb = min(tb, _round_up(pl.cdiv(batch, 2), 8))
    grid = (pl.cdiv(batch, tb),)

    flops = 2 * batch * D_IN * (D_IN + D_IN + D_PAD) + 4 * batch * D_IN
    bytes_accessed = (x.size * x.dtype.itemsize          # input read
                      + batch * D_PAD * 2                # bf16 output write
                      + w_packed.size * 2                # bf16 weights
                      + b_packed.size * 4)               # f32 biases

    compiler_params = pltpu.CompilerParams(
        dimension_semantics=("parallel",),
        # Only needed for very large tiles on v5e's 16 MiB scoped default.
        vmem_limit_bytes=(32 << 20) if tb >= 2048 else None,
    )

    out = pl.pallas_call(
        mog_netq_kernel,
        out_shape=jax.ShapeDtypeStruct((batch, D_PAD), jnp.bfloat16),
        grid=grid,
        in_specs=[
            pl.BlockSpec((tb, D_IN), lambda i: (i, 0)),                    # x tile
            pl.BlockSpec((N_LAYERS, D_IN, D_IN), lambda i: (0, 0, 0)),     # weights (resident)
            pl.BlockSpec((N_LAYERS, 1, D_IN), lambda i: (0, 0, 0)),        # biases (resident)
        ],
        out_specs=pl.BlockSpec((tb, D_PAD), lambda i: (i, 0)),
        compiler_params=compiler_params,
        cost_estimate=pl.CostEstimate(flops=flops, transcendentals=0,
                                      bytes_accessed=bytes_accessed),
    )(x, w_packed, b_packed)
    return out[:batch, :D_OUT].astype(jnp.float32)


def init_params(key):
    """PyTorch nn.Linear default init: U(-1/sqrt(fan_in), 1/sqrt(fan_in))."""
    dims = [(256, 256), (256, 256), (256, 2)]
    params = []
    for fin, fout in dims:
        key, kw, kb = jax.random.split(key, 3)
        bound = 1.0 / jnp.sqrt(float(fin))
        w = jax.random.uniform(kw, (fin, fout), jnp.float32, -bound, bound)
        b = jax.random.uniform(kb, (fout,), jnp.float32, -bound, bound)
        params.append((w, b))
    return params


def pack_params(params):
    """Pack (W (in,out), b (out,)) layers into (3,256,256) bf16 + (3,1,256) f32.
    The last layer only uses columns [:128] (real outputs in [:2])."""
    ws, bs = [], []
    for w, b in params:
        _, fout = w.shape
        wp = jnp.zeros((D_IN, D_IN), jnp.float32).at[:, :fout].set(w)
        bp = jnp.zeros((D_IN,), jnp.float32).at[:fout].set(b)
        ws.append(wp)
        bs.append(bp)
    w_packed = jnp.stack(ws).astype(jnp.bfloat16)   # (3, 256, 256)
    b_packed = jnp.stack(bs)[:, None, :]            # (3, 1, 256) f32
    return w_packed, b_packed


def reference_forward(x, params):
    """Pure-JAX reference mirroring the kernel's numerics (bf16 weights and
    bf16 activation casts, f32 accumulation)."""
    h = x.astype(jnp.float32)
    for i, (w, b) in enumerate(params):
        wq = w.astype(jnp.bfloat16)
        z = jnp.dot(h.astype(jnp.bfloat16), wq,
                    preferred_element_type=jnp.float32) + b
        h = jnp.maximum(z, NEG_SLOPE * z) if i < len(params) - 1 else z
    return h


if __name__ == "__main__":
    key = jax.random.PRNGKey(0)
    key, kx = jax.random.split(key)
    batch = 16
    x = jax.random.normal(kx, (batch, D_IN), jnp.float32)
    params = init_params(key)
    w_packed, b_packed = pack_params(params)

    # Single-tile f32-input path.
    out = jax.block_until_ready(mog_netq_forward(x, w_packed, b_packed))
    ref = reference_forward(x, params)
    assert out.shape == (batch, D_OUT)
    assert jnp.allclose(out, ref[:, :D_OUT], atol=2e-2, rtol=2e-2), \
        "mismatch vs JAX reference"

    # Ragged multi-tile path (13 rows, 8-row tiles) with a bf16 input:
    # exercises the grid + partial-last-block path and the bf16-x fast path.
    x13 = x[:13].astype(jnp.bfloat16)
    out2 = jax.block_until_ready(
        mog_netq_forward(x13, w_packed, b_packed, block_batch=8))
    ref2 = reference_forward(x13, params)
    assert out2.shape == (13, D_OUT)
    assert jnp.allclose(out2, ref2[:, :D_OUT], atol=2e-2, rtol=2e-2), \
        "mismatch (ragged tiled path)"

    print("KERNEL_OK")
</pallas_src>

<mosaic_0001>
module attributes {stable_mosaic.version = 11 : i64} {
  func.func @mog_netq_kernel(%arg0: i32, %arg1: memref<16x256xf32, #tpu.memory_space<vmem>>, %arg2: memref<3x256x256xbf16, #tpu.memory_space<vmem>>, %arg3: memref<3x1x256xf32, #tpu.memory_space<vmem>>, %arg4: memref<16x128xbf16, #tpu.memory_space<vmem>>) attributes {dimension_semantics = [#tpu.dimension_semantics<parallel>], iteration_bounds = array<i64: 1>, scalar_prefetch = 0 : i64, scratch_operands = 0 : i64, tpu.core_type = #tpu.core_type<tc>, window_params = [{transform_indices = @transform_0, window_bounds = array<i64: 16, 256>}, {pipeline_mode = #tpu.pipeline_mode<synchronous>, transform_indices = @transform_1, window_bounds = array<i64: 3, 256, 256>}, {pipeline_mode = #tpu.pipeline_mode<synchronous>, transform_indices = @transform_2, window_bounds = array<i64: 3, 1, 256>}, {transform_indices = @transform_3, window_bounds = array<i64: 16, 128>}]} {
    %c0 = arith.constant 0 : index
    %c0_0 = arith.constant 0 : index
    %0 = vector.load %arg1[%c0, %c0_0] : memref<16x256xf32, #tpu.memory_space<vmem>>, vector<16x256xf32>
    %1 = arith.truncf %0 : vector<16x256xf32> to vector<16x256xbf16>
    %c0_1 = arith.constant 0 : index
    %c0_2 = arith.constant 0 : index
    %c0_3 = arith.constant 0 : index
    %2 = vector.load %arg2[%c0_1, %c0_2, %c0_3] : memref<3x256x256xbf16, #tpu.memory_space<vmem>>, vector<1x256x256xbf16>
    %3 = vector.shape_cast %2 : vector<1x256x256xbf16> to vector<256x256xbf16>
    %cst = arith.constant dense<0.000000e+00> : vector<16x256xf32>
    %4 = tpu.matmul %1, %3, %cst {dimension_numbers = #tpu.dot_dimension_numbers<[1], [0], [0], [1], [0, 0, 1, 1], [], []>} : vector<16x256xbf16>, vector<256x256xbf16>, vector<16x256xf32> -> vector<16x256xf32>
    %c0_4 = arith.constant 0 : index
    %c0_5 = arith.constant 0 : index
    %c0_6 = arith.constant 0 : index
    %5 = vector.load %arg3[%c0_4, %c0_5, %c0_6] : memref<3x1x256xf32, #tpu.memory_space<vmem>>, vector<1x1x256xf32>
    %6 = vector.shape_cast %5 : vector<1x1x256xf32> to vector<1x256xf32>
    %7 = vector.broadcast %6 : vector<1x256xf32> to vector<16x256xf32>
    %8 = arith.addf %4, %7 : vector<16x256xf32>
    %cst_7 = arith.constant 0.00999999977 : f32
    %9 = vector.broadcast %cst_7 : f32 to vector<16x256xf32>
    %10 = arith.mulf %9, %8 : vector<16x256xf32>
    %11 = arith.maximumf %8, %10 : vector<16x256xf32>
    %12 = arith.truncf %11 : vector<16x256xf32> to vector<16x256xbf16>
    %c1 = arith.constant 1 : index
    %c0_8 = arith.constant 0 : index
    %c0_9 = arith.constant 0 : index
    %13 = vector.load %arg2[%c1, %c0_8, %c0_9] : memref<3x256x256xbf16, #tpu.memory_space<vmem>>, vector<1x256x256xbf16>
    %14 = vector.shape_cast %13 : vector<1x256x256xbf16> to vector<256x256xbf16>
    %cst_10 = arith.constant dense<0.000000e+00> : vector<16x256xf32>
    %15 = tpu.matmul %12, %14, %cst_10 {dimension_numbers = #tpu.dot_dimension_numbers<[1], [0], [0], [1], [0, 0, 1, 1], [], []>} : vector<16x256xbf16>, vector<256x256xbf16>, vector<16x256xf32> -> vector<16x256xf32>
    %c1_11 = arith.constant 1 : index
    %c0_12 = arith.constant 0 : index
    %c0_13 = arith.constant 0 : index
    %16 = vector.load %arg3[%c1_11, %c0_12, %c0_13] : memref<3x1x256xf32, #tpu.memory_space<vmem>>, vector<1x1x256xf32>
    %17 = vector.shape_cast %16 : vector<1x1x256xf32> to vector<1x256xf32>
    %18 = vector.broadcast %17 : vector<1x256xf32> to vector<16x256xf32>
    %19 = arith.addf %15, %18 : vector<16x256xf32>
    %cst_14 = arith.constant 0.00999999977 : f32
    %20 = vector.broadcast %cst_14 : f32 to vector<16x256xf32>
    %21 = arith.mulf %20, %19 : vector<16x256xf32>
    %22 = arith.maximumf %19, %21 : vector<16x256xf32>
    %23 = arith.truncf %22 : vector<16x256xf32> to vector<16x256xbf16>
    %c2 = arith.constant 2 : index
    %c0_15 = arith.constant 0 : index
    %c0_16 = arith.constant 0 : index
    %24 = vector.load %arg2[%c2, %c0_15, %c0_16] : memref<3x256x256xbf16, #tpu.memory_space<vmem>>, vector<1x256x128xbf16>
    %25 = vector.shape_cast %24 : vector<1x256x128xbf16> to vector<256x128xbf16>
    %cst_17 = arith.constant dense<0.000000e+00> : vector<16x128xf32>
    %26 = tpu.matmul %23, %25, %cst_17 {dimension_numbers = #tpu.dot_dimension_numbers<[1], [0], [0], [1], [0, 0, 1, 1], [], []>} : vector<16x256xbf16>, vector<256x128xbf16>, vector<16x128xf32> -> vector<16x128xf32>
    %c2_18 = arith.constant 2 : index
    %c0_19 = arith.constant 0 : index
    %c0_20 = arith.constant 0 : index
    %27 = vector.load %arg3[%c2_18, %c0_19, %c0_20] : memref<3x1x256xf32, #tpu.memory_space<vmem>>, vector<1x1x128xf32>
    %28 = vector.shape_cast %27 : vector<1x1x128xf32> to vector<1x128xf32>
    %29 = vector.broadcast %28 : vector<1x128xf32> to vector<16x128xf32>
    %30 = arith.addf %26, %29 : vector<16x128xf32>
    %31 = arith.truncf %30 : vector<16x128xf32> to vector<16x128xbf16>
    %c0_21 = arith.constant 0 : index
    %c0_22 = arith.constant 0 : index
    %32 = vector.load %arg4[%c0_21, %c0_22] : memref<16x128xbf16, #tpu.memory_space<vmem>>, vector<16x128xbf16>
    tpu.vector_store %arg4[%c0_21, %c0_22], %31 {strides = array<i32>} : memref<16x128xbf16, #tpu.memory_space<vmem>>, vector<16x128xbf16>,
    return
  }
  func.func @transform_0(%arg0: i32) -> (i32, i32) {
    %c0_i32 = arith.constant 0 : i32
    %c0_i32_0 = arith.constant 0 : i32
    return %arg0, %c0_i32 : i32, i32
  }
  func.func @transform_1(%arg0: i32) -> (i32, i32, i32) {
    %c0_i32 = arith.constant 0 : i32
    %c0_i32_0 = arith.constant 0 : i32
    %c0_i32_1 = arith.constant 0 : i32
    %c0_i32_2 = arith.constant 0 : i32
    return %c0_i32, %c0_i32_0, %c0_i32_1 : i32, i32, i32
  }
  func.func @transform_2(%arg0: i32) -> (i32, i32, i32) {
    %c0_i32 = arith.constant 0 : i32
    %c0_i32_0 = arith.constant 0 : i32
    %c0_i32_1 = arith.constant 0 : i32
    %c0_i32_2 = arith.constant 0 : i32
    return %c0_i32, %c0_i32_0, %c0_i32_1 : i32, i32, i32
  }
  func.func @transform_3(%arg0: i32) -> (i32, i32) {
    %c0_i32 = arith.constant 0 : i32
    %c0_i32_0 = arith.constant 0 : i32
    return %arg0, %c0_i32 : i32, i32
  }
}

</mosaic_0001>

<llo_original>
// kernel: tpu_custom_call.1
$region0: #{tpu_custom_call.1}
  #allocation0 [shape = 'u32[]', space=smem, size = 0x4, offset = 0x4, fixed_abs, tag = 'smem constant byte address 0x4 - core index']
  #allocation1 [shape = 'u32[144,128]{1,0:T(1,128)}', space=vmem, size = 0x12000, scoped, tag = 'internal scratch']
  %s0 = inlined_call_operand.hbm [shape: f32[16,256], index: 0, kind: input, shape index: {}]
  %s1 = inlined_call_operand.hbm [shape: bf16[3,256,256], index: 1, kind: input, shape index: {}]
  %s2 = inlined_call_operand.vmem [shape: f32[3,1,256], index: 2, kind: input, shape index: {}]
  %s3 = inlined_call_operand.hbm [shape: bf16[16,128], index: 3, kind: output, shape index: {}]
  %s4 = sld [smem:[#allocation0]]
  $region30: #{tpu_custom_call.1} parent=0
    _
  %s6 = ssub.s32 1, %s4
  %s7 = scalar_select 0, %s6, %s4
  $region1: #{tpu_custom_call.1} parent=0
    #allocation2 [shape = 'u8[16384]{0}', space=vmem, size = 0x4000, scoped, tag = 'input window, operand 0, single buffered']
    #allocation3 [shape = 's32[1]{0}', space=sflag, size = 0x4, scoped, tag = 'scoped memory for tpu_custom_call.1']
    #allocation4 [shape = 's32[1]{0}', space=sflag, size = 0x4, scoped, tag = 'scoped memory for tpu_custom_call.1']
    #allocation5 [shape = 'u8[393216]{0}', space=vmem, size = 0x60000, scoped, tag = 'input window, operand 1, single buffered']
    #allocation6 [shape = 's32[1]{0}', space=sflag, size = 0x4, scoped, tag = 'scoped memory for tpu_custom_call.1']
    #allocation7 [shape = 'u8[4096]{0}', space=vmem, size = 0x1000, scoped, tag = 'output window, operand 0, single buffered']
    %8 = vsyncpa [#allocation3], 0
    %9 = vsyncpa [#allocation6], 0
    %10 = vsyncpa [#allocation4], 0
    // Predicated region
    $region2: #{tpu_custom_call.1} parent=1 // pred_check
      _
    $region3: #{tpu_custom_call.1} parent=1 // pred_check_branch
      %12 = sbr.rel (0) target = $region5
    $region4: #{tpu_custom_call.1} parent=1 // pred_region
      %s14 = ssub.s32 512, 512
      %15 = vsyncadd [#allocation3], %s14
      %s16 = sshll.u32 [#allocation2], 4
      %s17 = int_to_ptr.vmem [resolvable:$true] %s16
      %22 = dma.hbm_to_vmem [thread:$0]  %s0, 512, %s17, [#allocation3], 256, 256, 16
    $region5: #{tpu_custom_call.1} parent=1 // pred_fallthru
      _
    // Predicated region
    $region6: #{tpu_custom_call.1} parent=1 // pred_check
      _
    $region7: #{tpu_custom_call.1} parent=1 // pred_check_branch
      %24 = sbr.rel (0) target = $region9
    $region8: #{tpu_custom_call.1} parent=1 // pred_region
      %s26 = ssub.s32 12288, 12288
      %27 = vsyncadd [#allocation6], %s26
      %s28 = sshll.u32 [#allocation5], 4
      %s29 = int_to_ptr.vmem [resolvable:$true] %s28
      %34 = dma.hbm_to_vmem [thread:$0]  %s1, 12288, %s29, [#allocation6], 128, 128, 8
    $region9: #{tpu_custom_call.1} parent=1 // pred_fallthru
      _
    // Predicated region
    $region10: #{tpu_custom_call.1} parent=1 // pred_check
      _
    $region11: #{tpu_custom_call.1} parent=1 // pred_check_branch
      %36 = sbr.rel (0) target = $region13
    $region12: #{tpu_custom_call.1} parent=1 // pred_region
      _
    $region13: #{tpu_custom_call.1} parent=1 // pred_fallthru
      _
    // Predicated region
    $region14: #{tpu_custom_call.1} parent=1 // pred_check
      _
    $region15: #{tpu_custom_call.1} parent=1 // pred_check_branch
      %38 = sbr.rel (0) target = $region17
    $region16: #{tpu_custom_call.1} parent=1 // pred_region
      %39 = dma.done [#allocation3], 512
    $region17: #{tpu_custom_call.1} parent=1 // pred_fallthru
      _
    // Predicated region
    $region18: #{tpu_custom_call.1} parent=1 // pred_check
      _
    $region19: #{tpu_custom_call.1} parent=1 // pred_check_branch
      %41 = sbr.rel (0) target = $region21
    $region20: #{tpu_custom_call.1} parent=1 // pred_region
      %42 = dma.done [#allocation6], 12288
    $region21: #{tpu_custom_call.1} parent=1 // pred_fallthru
      _
    %v44 = vld [vmem:[#allocation2] sm:$0xff]
    %v45 = vld [vmem:[#allocation2 + $0x8] sm:$0xff]
    %v46 = vld [vmem:[#allocation2 + $0x10] sm:$0xff]
    %v47 = vld [vmem:[#allocation2 + $0x18] sm:$0xff]
    %v48 = vpack.c.bf16 %v46, %v44
    %v49 = vpack.c.bf16 %v47, %v45
    %v50 = vld [vmem:[#allocation5] sm:$0xff]
    %v51 = vld [vmem:[#allocation5 + $0x8] sm:$0xff]
    %v52 = vld [vmem:[#allocation5 + $0x10] sm:$0xff]
    %v53 = vld [vmem:[#allocation5 + $0x18] sm:$0xff]
    %v54 = vld [vmem:[#allocation5 + $0x20] sm:$0xff]
    %v55 = vld [vmem:[#allocation5 + $0x28] sm:$0xff]
    %v56 = vld [vmem:[#allocation5 + $0x30] sm:$0xff]
    %v57 = vld [vmem:[#allocation5 + $0x38] sm:$0xff]
    %v58 = vld [vmem:[#allocation5 + $0x40] sm:$0xff]
    %v59 = vld [vmem:[#allocation5 + $0x48] sm:$0xff]
    %v60 = vld [vmem:[#allocation5 + $0x50] sm:$0xff]
    %v61 = vld [vmem:[#allocation5 + $0x58] sm:$0xff]
    %v62 = vld [vmem:[#allocation5 + $0x60] sm:$0xff]
    %v63 = vld [vmem:[#allocation5 + $0x68] sm:$0xff]
    %v64 = vld [vmem:[#allocation5 + $0x70] sm:$0xff]
    %v65 = vld [vmem:[#allocation5 + $0x78] sm:$0xff]
    %v66 = vld [vmem:[#allocation5 + $0x80] sm:$0xff]
    %v67 = vld [vmem:[#allocation5 + $0x88] sm:$0xff]
    %v68 = vld [vmem:[#allocation5 + $0x90] sm:$0xff]
    %v69 = vld [vmem:[#allocation5 + $0x98] sm:$0xff]
    %v70 = vld [vmem:[#allocation5 + $0xa0] sm:$0xff]
    %v71 = vld [vmem:[#allocation5 + $0xa8] sm:$0xff]
    %v72 = vld [vmem:[#allocation5 + $0xb0] sm:$0xff]
    %v73 = vld [vmem:[#allocation5 + $0xb8] sm:$0xff]
    %v74 = vld [vmem:[#allocation5 + $0xc0] sm:$0xff]
    %v75 = vld [vmem:[#allocation5 + $0xc8] sm:$0xff]
    %v76 = vld [vmem:[#allocation5 + $0xd0] sm:$0xff]
    %v77 = vld [vmem:[#allocation5 + $0xd8] sm:$0xff]
    %v78 = vld [vmem:[#allocation5 + $0xe0] sm:$0xff]
    %v79 = vld [vmem:[#allocation5 + $0xe8] sm:$0xff]
    %v80 = vld [vmem:[#allocation5 + $0xf0] sm:$0xff]
    %v81 = vld [vmem:[#allocation5 + $0xf8] sm:$0xff]
    %v82 = vld [vmem:[%s2] sm:$0x3]
    %v84 = vlaneseq
    %v85 = vshrl.u32 %v84, 7
    %v86 = vsub.s32 0, %v85
    %v87 = vrot.slane %v82, %v86
    %v88 = vlaneseq
    %v89 = vshrl.u32 %v88, 7
    %v90 = vsub.s32 1, %v89
    %v91 = vrot.slane %v82, %v90
    %v126 = vunpack.c.l.b16 %v50
    %v127 = vunpack.c.h.b16 %v50
    %v128 = vunpack.c.l.b16 %v51
    %v129 = vunpack.c.h.b16 %v51
    %v130 = vunpack.c.l.b16 %v52
    %v131 = vunpack.c.h.b16 %v52
    %v132 = vunpack.c.l.b16 %v53
    %v133 = vunpack.c.h.b16 %v53
    %v134 = vunpack.c.l.b16 %v54
    %v135 = vunpack.c.h.b16 %v54
    %v136 = vunpack.c.l.b16 %v55
    %v137 = vunpack.c.h.b16 %v55
    %v138 = vunpack.c.l.b16 %v56
    %v139 = vunpack.c.h.b16 %v56
    %v140 = vunpack.c.l.b16 %v57
    %v141 = vunpack.c.h.b16 %v57
    %v142 = vunpack.c.l.b16 %v58
    %v143 = vunpack.c.h.b16 %v58
    %v144 = vunpack.c.l.b16 %v59
    %v145 = vunpack.c.h.b16 %v59
    %v146 = vunpack.c.l.b16 %v60
    %v147 = vunpack.c.h.b16 %v60
    %v148 = vunpack.c.l.b16 %v61
    %v149 = vunpack.c.h.b16 %v61
    %v150 = vunpack.c.l.b16 %v62
    %v151 = vunpack.c.h.b16 %v62
    %v152 = vunpack.c.l.b16 %v63
    %v153 = vunpack.c.h.b16 %v63
    %v154 = vunpack.c.l.b16 %v64
    %v155 = vunpack.c.h.b16 %v64
    %v156 = vunpack.c.l.b16 %v65
    %v157 = vunpack.c.h.b16 %v65
    %v158 = vunpack.c.l.b16 %v66
    %v159 = vunpack.c.h.b16 %v66
    %v160 = vunpack.c.l.b16 %v67
    %v161 = vunpack.c.h.b16 %v67
    %v162 = vunpack.c.l.b16 %v68
    %v163 = vunpack.c.h.b16 %v68
    %v164 = vunpack.c.l.b16 %v69
    %v165 = vunpack.c.h.b16 %v69
    %v166 = vunpack.c.l.b16 %v70
    %v167 = vunpack.c.h.b16 %v70
    %v168 = vunpack.c.l.b16 %v71
    %v169 = vunpack.c.h.b16 %v71
    %v170 = vunpack.c.l.b16 %v72
    %v171 = vunpack.c.h.b16 %v72
    %v172 = vunpack.c.l.b16 %v73
    %v173 = vunpack.c.h.b16 %v73
    %v174 = vunpack.c.l.b16 %v74
    %v175 = vunpack.c.h.b16 %v74
    %v176 = vunpack.c.l.b16 %v75
    %v177 = vunpack.c.h.b16 %v75
    %v178 = vunpack.c.l.b16 %v76
    %v179 = vunpack.c.h.b16 %v76
    %v180 = vunpack.c.l.b16 %v77
    %v181 = vunpack.c.h.b16 %v77
    %v182 = vunpack.c.l.b16 %v78
    %v183 = vunpack.c.h.b16 %v78
    %v184 = vunpack.c.l.b16 %v79
    %v185 = vunpack.c.h.b16 %v79
    %v186 = vunpack.c.l.b16 %v80
    %v187 = vunpack.c.h.b16 %v80
    %v188 = vunpack.c.l.b16 %v81
    %v189 = vunpack.c.h.b16 %v81
    %v190 = vpack.c.b16 %v128, %v126
    %v191 = vpack.c.b16 %v129, %v127
    %v192 = vpack.c.b16 %v132, %v130
    %v193 = vpack.c.b16 %v133, %v131
    %v194 = vpack.c.b16 %v136, %v134
    %v195 = vpack.c.b16 %v137, %v135
    %v196 = vpack.c.b16 %v140, %v138
    %v197 = vpack.c.b16 %v141, %v139
    %v198 = vpack.c.b16 %v144, %v142
    %v199 = vpack.c.b16 %v145, %v143
    %v200 = vpack.c.b16 %v148, %v146
    %v201 = vpack.c.b16 %v149, %v147
    %v202 = vpack.c.b16 %v152, %v150
    %v203 = vpack.c.b16 %v153, %v151
    %v204 = vpack.c.b16 %v156, %v154
    %v205 = vpack.c.b16 %v157, %v155
    %v206 = vpack.c.b16 %v160, %v158
    %v207 = vpack.c.b16 %v161, %v159
    %v208 = vpack.c.b16 %v164, %v162
    %v209 = vpack.c.b16 %v165, %v163
    %v210 = vpack.c.b16 %v168, %v166
    %v211 = vpack.c.b16 %v169, %v167
    %v212 = vpack.c.b16 %v172, %v170
    %v213 = vpack.c.b16 %v173, %v171
    %v214 = vpack.c.b16 %v176, %v174
    %v215 = vpack.c.b16 %v177, %v175
    %v216 = vpack.c.b16 %v180, %v178
    %v217 = vpack.c.b16 %v181, %v179
    %v218 = vpack.c.b16 %v184, %v182
    %v219 = vpack.c.b16 %v185, %v183
    %v220 = vpack.c.b16 %v188, %v186
    %v221 = vpack.c.b16 %v189, %v187
    %254 = vmatprep.subr.bf16.mxu0 %v191
    %255 = vmatpush1.bf16.msra.mxu0 %v190
    %256 = vmatprep.subr.bf16.mxu0 %v193
    %257 = vmatpush1.bf16.msra.mxu0 %v192
    %258 = vmatprep.subr.bf16.mxu0 %v195
    %259 = vmatpush1.bf16.msra.mxu0 %v194
    %260 = vmatprep.subr.bf16.mxu0 %v197
    %261 = vmatpush1.bf16.msra.mxu0 %v196
    %262 = vmatprep.subr.bf16.mxu0 %v199
    %263 = vmatpush1.bf16.msra.mxu0 %v198
    %264 = vmatprep.subr.bf16.mxu0 %v201
    %265 = vmatpush1.bf16.msra.mxu0 %v200
    %266 = vmatprep.subr.bf16.mxu0 %v203
    %267 = vmatpush1.bf16.msra.mxu0 %v202
    %268 = vmatprep.subr.bf16.mxu0 %v205
    %269 = vmatpush1.bf16.msra.mxu0 %v204
    %270 = vmatprep.subr.bf16.mxu0 %v207
    %271 = vmatpush1.bf16.msra.mxu0 %v206
    %272 = vmatprep.subr.bf16.mxu0 %v209
    %273 = vmatpush1.bf16.msra.mxu0 %v208
    %274 = vmatprep.subr.bf16.mxu0 %v211
    %275 = vmatpush1.bf16.msra.mxu0 %v210
    %276 = vmatprep.subr.bf16.mxu0 %v213
    %277 = vmatpush1.bf16.msra.mxu0 %v212
    %278 = vmatprep.subr.bf16.mxu0 %v215
    %279 = vmatpush1.bf16.msra.mxu0 %v214
    %280 = vmatprep.subr.bf16.mxu0 %v217
    %281 = vmatpush1.bf16.msra.mxu0 %v216
    %282 = vmatprep.subr.bf16.mxu0 %v219
    %283 = vmatpush1.bf16.msra.mxu0 %v218
    %284 = vmatprep.subr.bf16.mxu0 %v221
    %285 = vmatpush1.bf16.msra.mxu0 %v220
    %286 = vmatprep.mubr.bf16.mxu0 %v49
    %287 = vmatmul.mubr.bf16.gmra.mrb[0].mxu0 %v48
    %v288 = vpop.f32.mrb[0].mxu0
    %v289 = vadd.f32 %v87, %v288
    %v290 = vpop.f32.mrb[0].mxu0
    %v291 = vadd.f32 %v91, %v290
    %v292 = vpop.f32.mrb[0].mxu0
    %v293 = vadd.f32 %v87, %v292
    %v294 = vpop.f32.mrb[0].mxu0
    %v295 = vadd.f32 %v91, %v294
    %296 = vdwg.mxu0
    %v297 = vmul.f32 %v289, 0.01
    %v298 = vmul.f32 %v291, 0.01
    %v299 = vmul.f32 %v293, 0.01
    %v300 = vmul.f32 %v295, 0.01
    %v301 = vmax.f32 %v289, %v297
    %v302 = vmax.f32 %v291, %v298
    %v303 = vmax.f32 %v293, %v299
    %v304 = vmax.f32 %v295, %v300
    %v305 = vpack.c.bf16 %v303, %v301
    %v306 = vpack.c.bf16 %v304, %v302
    %s307 = scalar_lea.vmem [#allocation5], 256
    %v308 = vld [vmem:[%s307] sm:$0xff]
    %v309 = vld [vmem:[%s307 + $0x8] sm:$0xff]
    %v310 = vld [vmem:[%s307 + $0x10] sm:$0xff]
    %v311 = vld [vmem:[%s307 + $0x18] sm:$0xff]
    %v312 = vld [vmem:[%s307 + $0x20] sm:$0xff]
    %v313 = vld [vmem:[%s307 + $0x28] sm:$0xff]
    %v314 = vld [vmem:[%s307 + $0x30] sm:$0xff]
    %v315 = vld [vmem:[%s307 + $0x38] sm:$0xff]
    %v316 = vld [vmem:[%s307 + $0x40] sm:$0xff]
    %v317 = vld [vmem:[%s307 + $0x48] sm:$0xff]
    %v318 = vld [vmem:[%s307 + $0x50] sm:$0xff]
    %v319 = vld [vmem:[%s307 + $0x58] sm:$0xff]
    %v320 = vld [vmem:[%s307 + $0x60] sm:$0xff]
    %v321 = vld [vmem:[%s307 + $0x68] sm:$0xff]
    %v322 = vld [vmem:[%s307 + $0x70] sm:$0xff]
    %v323 = vld [vmem:[%s307 + $0x78] sm:$0xff]
    %v324 = vld [vmem:[%s307 + $0x80] sm:$0xff]
    %v325 = vld [vmem:[%s307 + $0x88] sm:$0xff]
    %v326 = vld [vmem:[%s307 + $0x90] sm:$0xff]
    %v327 = vld [vmem:[%s307 + $0x98] sm:$0xff]
    %v328 = vld [vmem:[%s307 + $0xa0] sm:$0xff]
    %v329 = vld [vmem:[%s307 + $0xa8] sm:$0xff]
    %v330 = vld [vmem:[%s307 + $0xb0] sm:$0xff]
    %v331 = vld [vmem:[%s307 + $0xb8] sm:$0xff]
    %v332 = vld [vmem:[%s307 + $0xc0] sm:$0xff]
    %v333 = vld [vmem:[%s307 + $0xc8] sm:$0xff]
    %v334 = vld [vmem:[%s307 + $0xd0] sm:$0xff]
    %v335 = vld [vmem:[%s307 + $0xd8] sm:$0xff]
    %v336 = vld [vmem:[%s307 + $0xe0] sm:$0xff]
    %v337 = vld [vmem:[%s307 + $0xe8] sm:$0xff]
    %v338 = vld [vmem:[%s307 + $0xf0] sm:$0xff]
    %v339 = vld [vmem:[%s307 + $0xf8] sm:$0xff]
    %s340 = scalar_lea.vmem %s2, 2
    %v341 = vld [vmem:[%s340] sm:$0x3]
    %v343 = vlaneseq
    %v344 = vshrl.u32 %v343, 7
    %v345 = vsub.s32 0, %v344
    %v346 = vrot.slane %v341, %v345
    %v347 = vlaneseq
    %v348 = vshrl.u32 %v347, 7
    %v349 = vsub.s32 1, %v348
    %v350 = vrot.slane %v341, %v349
    %v385 = vunpack.c.l.b16 %v308
    %v386 = vunpack.c.h.b16 %v308
    %v387 = vunpack.c.l.b16 %v309
    %v388 = vunpack.c.h.b16 %v309
    %v389 = vunpack.c.l.b16 %v310
    %v390 = vunpack.c.h.b16 %v310
    %v391 = vunpack.c.l.b16 %v311
    %v392 = vunpack.c.h.b16 %v311
    %v393 = vunpack.c.l.b16 %v312
    %v394 = vunpack.c.h.b16 %v312
    %v395 = vunpack.c.l.b16 %v313
    %v396 = vunpack.c.h.b16 %v313
    %v397 = vunpack.c.l.b16 %v314
    %v398 = vunpack.c.h.b16 %v314
    %v399 = vunpack.c.l.b16 %v315
    %v400 = vunpack.c.h.b16 %v315
    %v401 = vunpack.c.l.b16 %v316
    %v402 = vunpack.c.h.b16 %v316
    %v403 = vunpack.c.l.b16 %v317
    %v404 = vunpack.c.h.b16 %v317
    %v405 = vunpack.c.l.b16 %v318
    %v406 = vunpack.c.h.b16 %v318
    %v407 = vunpack.c.l.b16 %v319
    %v408 = vunpack.c.h.b16 %v319
    %v409 = vunpack.c.l.b16 %v320
    %v410 = vunpack.c.h.b16 %v320
    %v411 = vunpack.c.l.b16 %v321
    %v412 = vunpack.c.h.b16 %v321
    %v413 = vunpack.c.l.b16 %v322
    %v414 = vunpack.c.h.b16 %v322
    %v415 = vunpack.c.l.b16 %v323
    %v416 = vunpack.c.h.b16 %v323
    %v417 = vunpack.c.l.b16 %v324
    %v418 = vunpack.c.h.b16 %v324
    %v419 = vunpack.c.l.b16 %v325
    %v420 = vunpack.c.h.b16 %v325
    %v421 = vunpack.c.l.b16 %v326
    %v422 = vunpack.c.h.b16 %v326
    %v423 = vunpack.c.l.b16 %v327
    %v424 = vunpack.c.h.b16 %v327
    %v425 = vunpack.c.l.b16 %v328
    %v426 = vunpack.c.h.b16 %v328
    %v427 = vunpack.c.l.b16 %v329
    %v428 = vunpack.c.h.b16 %v329
    %v429 = vunpack.c.l.b16 %v330
    %v430 = vunpack.c.h.b16 %v330
    %v431 = vunpack.c.l.b16 %v331
    %v432 = vunpack.c.h.b16 %v331
    %v433 = vunpack.c.l.b16 %v332
    %v434 = vunpack.c.h.b16 %v332
    %v435 = vunpack.c.l.b16 %v333
    %v436 = vunpack.c.h.b16 %v333
    %v437 = vunpack.c.l.b16 %v334
    %v438 = vunpack.c.h.b16 %v334
    %v439 = vunpack.c.l.b16 %v335
    %v440 = vunpack.c.h.b16 %v335
    %v441 = vunpack.c.l.b16 %v336
    %v442 = vunpack.c.h.b16 %v336
    %v443 = vunpack.c.l.b16 %v337
    %v444 = vunpack.c.h.b16 %v337
    %v445 = vunpack.c.l.b16 %v338
    %v446 = vunpack.c.h.b16 %v338
    %v447 = vunpack.c.l.b16 %v339
    %v448 = vunpack.c.h.b16 %v339
    %v449 = vpack.c.b16 %v387, %v385
    %v450 = vpack.c.b16 %v388, %v386
    %v451 = vpack.c.b16 %v391, %v389
    %v452 = vpack.c.b16 %v392, %v390
    %v453 = vpack.c.b16 %v395, %v393
    %v454 = vpack.c.b16 %v396, %v394
    %v455 = vpack.c.b16 %v399, %v397
    %v456 = vpack.c.b16 %v400, %v398
    %v457 = vpack.c.b16 %v403, %v401
    %v458 = vpack.c.b16 %v404, %v402
    %v459 = vpack.c.b16 %v407, %v405
    %v460 = vpack.c.b16 %v408, %v406
    %v461 = vpack.c.b16 %v411, %v409
    %v462 = vpack.c.b16 %v412, %v410
    %v463 = vpack.c.b16 %v415, %v413
    %v464 = vpack.c.b16 %v416, %v414
    %v465 = vpack.c.b16 %v419, %v417
    %v466 = vpack.c.b16 %v420, %v418
    %v467 = vpack.c.b16 %v423, %v421
    %v468 = vpack.c.b16 %v424, %v422
    %v469 = vpack.c.b16 %v427, %v425
    %v470 = vpack.c.b16 %v428, %v426
    %v471 = vpack.c.b16 %v431, %v429
    %v472 = vpack.c.b16 %v432, %v430
    %v473 = vpack.c.b16 %v435, %v433
    %v474 = vpack.c.b16 %v436, %v434
    %v475 = vpack.c.b16 %v439, %v437
    %v476 = vpack.c.b16 %v440, %v438
    %v477 = vpack.c.b16 %v443, %v441
    %v478 = vpack.c.b16 %v444, %v442
    %v479 = vpack.c.b16 %v447, %v445
    %v480 = vpack.c.b16 %v448, %v446
    %513 = vmatprep.subr.bf16.mxu0 %v450
    %514 = vmatpush1.bf16.msra.mxu0 %v449
    %515 = vmatprep.subr.bf16.mxu0 %v452
    %516 = vmatpush1.bf16.msra.mxu0 %v451
    %517 = vmatprep.subr.bf16.mxu0 %v454
    %518 = vmatpush1.bf16.msra.mxu0 %v453
    %519 = vmatprep.subr.bf16.mxu0 %v456
    %520 = vmatpush1.bf16.msra.mxu0 %v455
    %521 = vmatprep.subr.bf16.mxu0 %v458
    %522 = vmatpush1.bf16.msra.mxu0 %v457
    %523 = vmatprep.subr.bf16.mxu0 %v460
    %524 = vmatpush1.bf16.msra.mxu0 %v459
    %525 = vmatprep.subr.bf16.mxu0 %v462
    %526 = vmatpush1.bf16.msra.mxu0 %v461
    %527 = vmatprep.subr.bf16.mxu0 %v464
    %528 = vmatpush1.bf16.msra.mxu0 %v463
    %529 = vmatprep.subr.bf16.mxu0 %v466
    %530 = vmatpush1.bf16.msra.mxu0 %v465
    %531 = vmatprep.subr.bf16.mxu0 %v468
    %532 = vmatpush1.bf16.msra.mxu0 %v467
    %533 = vmatprep.subr.bf16.mxu0 %v470
    %534 = vmatpush1.bf16.msra.mxu0 %v469
    %535 = vmatprep.subr.bf16.mxu0 %v472
    %536 = vmatpush1.bf16.msra.mxu0 %v471
    %537 = vmatprep.subr.bf16.mxu0 %v474
    %538 = vmatpush1.bf16.msra.mxu0 %v473
    %539 = vmatprep.subr.bf16.mxu0 %v476
    %540 = vmatpush1.bf16.msra.mxu0 %v475
    %541 = vmatprep.subr.bf16.mxu0 %v478
    %542 = vmatpush1.bf16.msra.mxu0 %v477
    %543 = vmatprep.subr.bf16.mxu0 %v480
    %544 = vmatpush1.bf16.msra.mxu0 %v479
    %545 = vmatprep.mubr.bf16.mxu0 %v306
    %546 = vmatmul.mubr.bf16.gmra.mrb[0].mxu0 %v305
    %v547 = vpop.f32.mrb[0].mxu0
    %v548 = vadd.f32 %v346, %v547
    %v549 = vpop.f32.mrb[0].mxu0
    %v550 = vadd.f32 %v350, %v549
    %v551 = vpop.f32.mrb[0].mxu0
    %v552 = vadd.f32 %v346, %v551
    %v553 = vpop.f32.mrb[0].mxu0
    %v554 = vadd.f32 %v350, %v553
    %555 = vdwg.mxu0
    %v556 = vmul.f32 %v548, 0.01
    %v557 = vmul.f32 %v550, 0.01
    %v558 = vmul.f32 %v552, 0.01
    %v559 = vmul.f32 %v554, 0.01
    %v560 = vmax.f32 %v548, %v556
    %v561 = vmax.f32 %v550, %v557
    %v562 = vmax.f32 %v552, %v558
    %v563 = vmax.f32 %v554, %v559
    %v564 = vpack.c.bf16 %v562, %v560
    %v565 = vpack.c.bf16 %v563, %v561
    %s566 = scalar_lea.vmem [#allocation5], 512
    %v567 = vld [vmem:[%s566] sm:$0xf]
    %v568 = vld [vmem:[%s566 + $0x8] sm:$0xf]
    %v569 = vld [vmem:[%s566 + $0x10] sm:$0xf]
    %v570 = vld [vmem:[%s566 + $0x18] sm:$0xf]
    %v571 = vld [vmem:[%s566 + $0x20] sm:$0xf]
    %v572 = vld [vmem:[%s566 + $0x28] sm:$0xf]
    %v573 = vld [vmem:[%s566 + $0x30] sm:$0xf]
    %v574 = vld [vmem:[%s566 + $0x38] sm:$0xf]
    %v575 = vld [vmem:[%s566 + $0x40] sm:$0xf]
    %v576 = vld [vmem:[%s566 + $0x48] sm:$0xf]
    %v577 = vld [vmem:[%s566 + $0x50] sm:$0xf]
    %v578 = vld [vmem:[%s566 + $0x58] sm:$0xf]
    %v579 = vld [vmem:[%s566 + $0x60] sm:$0xf]
    %v580 = vld [vmem:[%s566 + $0x68] sm:$0xf]
    %v581 = vld [vmem:[%s566 + $0x70] sm:$0xf]
    %v582 = vld [vmem:[%s566 + $0x78] sm:$0xf]
    %v583 = vld [vmem:[%s566 + $0x80] sm:$0xf]
    %v584 = vld [vmem:[%s566 + $0x88] sm:$0xf]
    %v585 = vld [vmem:[%s566 + $0x90] sm:$0xf]
    %v586 = vld [vmem:[%s566 + $0x98] sm:$0xf]
    %v587 = vld [vmem:[%s566 + $0xa0] sm:$0xf]
    %v588 = vld [vmem:[%s566 + $0xa8] sm:$0xf]
    %v589 = vld [vmem:[%s566 + $0xb0] sm:$0xf]
    %v590 = vld [vmem:[%s566 + $0xb8] sm:$0xf]
    %v591 = vld [vmem:[%s566 + $0xc0] sm:$0xf]
    %v592 = vld [vmem:[%s566 + $0xc8] sm:$0xf]
    %v593 = vld [vmem:[%s566 + $0xd0] sm:$0xf]
    %v594 = vld [vmem:[%s566 + $0xd8] sm:$0xf]
    %v595 = vld [vmem:[%s566 + $0xe0] sm:$0xf]
    %v596 = vld [vmem:[%s566 + $0xe8] sm:$0xf]
    %v597 = vld [vmem:[%s566 + $0xf0] sm:$0xf]
    %v598 = vld [vmem:[%s566 + $0xf8] sm:$0xf]
    %s599 = scalar_lea.vmem %s2, 4
    %v600 = vld [vmem:[%s599] sm:$0x1]
    %v602 = vlaneseq
    %v603 = vshrl.u32 %v602, 7
    %v604 = vsub.s32 0, %v603
    %v605 = vrot.slane %v600, %v604
    %v639 = vunpack.c.l.b16 %v567
    %v640 = vunpack.c.l.b16 %v568
    %v641 = vunpack.c.l.b16 %v569
    %v642 = vunpack.c.l.b16 %v570
    %v643 = vunpack.c.l.b16 %v571
    %v644 = vunpack.c.l.b16 %v572
    %v645 = vunpack.c.l.b16 %v573
    %v646 = vunpack.c.l.b16 %v574
    %v647 = vunpack.c.l.b16 %v575
    %v648 = vunpack.c.l.b16 %v576
    %v649 = vunpack.c.l.b16 %v577
    %v650 = vunpack.c.l.b16 %v578
    %v651 = vunpack.c.l.b16 %v579
    %v652 = vunpack.c.l.b16 %v580
    %v653 = vunpack.c.l.b16 %v581
    %v654 = vunpack.c.l.b16 %v582
    %v655 = vunpack.c.l.b16 %v583
    %v656 = vunpack.c.l.b16 %v584
    %v657 = vunpack.c.l.b16 %v585
    %v658 = vunpack.c.l.b16 %v586
    %v659 = vunpack.c.l.b16 %v587
    %v660 = vunpack.c.l.b16 %v588
    %v661 = vunpack.c.l.b16 %v589
    %v662 = vunpack.c.l.b16 %v590
    %v663 = vunpack.c.l.b16 %v591
    %v664 = vunpack.c.l.b16 %v592
    %v665 = vunpack.c.l.b16 %v593
    %v666 = vunpack.c.l.b16 %v594
    %v667 = vunpack.c.l.b16 %v595
    %v668 = vunpack.c.l.b16 %v596
    %v669 = vunpack.c.l.b16 %v597
    %v670 = vunpack.c.l.b16 %v598
    %v671 = vpack.c.b16 %v640, %v639
    %v672 = vpack.c.b16 %v642, %v641
    %v673 = vpack.c.b16 %v644, %v643
    %v674 = vpack.c.b16 %v646, %v645
    %v675 = vpack.c.b16 %v648, %v647
    %v676 = vpack.c.b16 %v650, %v649
    %v677 = vpack.c.b16 %v652, %v651
    %v678 = vpack.c.b16 %v654, %v653
    %v679 = vpack.c.b16 %v656, %v655
    %v680 = vpack.c.b16 %v658, %v657
    %v681 = vpack.c.b16 %v660, %v659
    %v682 = vpack.c.b16 %v662, %v661
    %v683 = vpack.c.b16 %v664, %v663
    %v684 = vpack.c.b16 %v666, %v665
    %v685 = vpack.c.b16 %v668, %v667
    %v686 = vpack.c.b16 %v670, %v669
    %703 = vmatprep.subr.bf16.mxu0 0
    %704 = vmatpush1.bf16.msra.mxu0 %v671
    %705 = vmatprep.subr.bf16.mxu0 0
    %706 = vmatpush1.bf16.msra.mxu0 %v672
    %707 = vmatprep.subr.bf16.mxu0 0
    %708 = vmatpush1.bf16.msra.mxu0 %v673
    %709 = vmatprep.subr.bf16.mxu0 0
    %710 = vmatpush1.bf16.msra.mxu0 %v674
    %711 = vmatprep.subr.bf16.mxu0 0
    %712 = vmatpush1.bf16.msra.mxu0 %v675
    %713 = vmatprep.subr.bf16.mxu0 0
    %714 = vmatpush1.bf16.msra.mxu0 %v676
    %715 = vmatprep.subr.bf16.mxu0 0
    %716 = vmatpush1.bf16.msra.mxu0 %v677
    %717 = vmatprep.subr.bf16.mxu0 0
    %718 = vmatpush1.bf16.msra.mxu0 %v678
    %719 = vmatprep.subr.bf16.mxu0 0
    %720 = vmatpush1.bf16.msra.mxu0 %v679
    %721 = vmatprep.subr.bf16.mxu0 0
    %722 = vmatpush1.bf16.msra.mxu0 %v680
    %723 = vmatprep.subr.bf16.mxu0 0
    %724 = vmatpush1.bf16.msra.mxu0 %v681
    %725 = vmatprep.subr.bf16.mxu0 0
    %726 = vmatpush1.bf16.msra.mxu0 %v682
    %727 = vmatprep.subr.bf16.mxu0 0
    %728 = vmatpush1.bf16.msra.mxu0 %v683
    %729 = vmatprep.subr.bf16.mxu0 0
    %730 = vmatpush1.bf16.msra.mxu0 %v684
    %731 = vmatprep.subr.bf16.mxu0 0
    %732 = vmatpush1.bf16.msra.mxu0 %v685
    %733 = vmatprep.subr.bf16.mxu0 0
    %734 = vmatpush1.bf16.msra.mxu0 %v686
    %735 = vmatprep.mubr.bf16.mxu0 %v565
    %736 = vmatmul.mubr.bf16.gmra.mrb[0].mxu0 %v564
    %v737 = vpop.f32.mrb[0].mxu0
    %v738 = vadd.f32 %v605, %v737
    %v739 = vpop.f32.mrb[0].mxu0
    %v740 = vpop.f32.mrb[0].mxu0
    %v741 = vadd.f32 %v605, %v740
    %v742 = vpop.f32.mrb[0].mxu0
    %743 = vdwg.mxu0
    %v744 = vpack.c.bf16 %v741, %v738
    %v746 = vunpack.c.l.b16 %v744
    %v747 = vunpack.c.h.b16 %v744
    %v748 = vpack.c.b16 %v746, %v746
    %v749 = vpack.c.b16 %v747, %v747
    %752 = vst [vmem:[#allocation7] sm:$0xf] %v748
    %753 = vst [vmem:[#allocation7 + $0x4] sm:$0xf] %v749
    // Predicated region
    $region22: #{tpu_custom_call.1} parent=1 // pred_check
      _
    $region23: #{tpu_custom_call.1} parent=1 // pred_check_branch
      %755 = sbr.rel (0) target = $region25
    $region24: #{tpu_custom_call.1} parent=1 // pred_region
      %s757 = ssub.s32 128, 128
      %758 = vsyncadd [#allocation4], %s757
      %s759 = sshll.u32 [#allocation7], 4
      %s760 = int_to_ptr.vmem [resolvable:$true] %s759
      %765 = dma.vmem_to_hbm [thread:$0]  %s760, 128, %s3, [#allocation4], 64, 64, 4
    $region25: #{tpu_custom_call.1} parent=1 // pred_fallthru
      _
    // Predicated region
    $region26: #{tpu_custom_call.1} parent=1 // pred_check
      _
    $region27: #{tpu_custom_call.1} parent=1 // pred_check_branch
      %767 = sbr.rel (0) target = $region29
    $region28: #{tpu_custom_call.1} parent=1 // pred_region
      %768 = dma.done [#allocation4], 128
    $region29: #{tpu_custom_call.1} parent=1 // pred_fallthru
      _
    %769 = vsyncpa [#allocation3], 1
    %770 = vsyncpa [#allocation6], 1
    %771 = vsyncpa [#allocation4], 1

</llo_original>
